<compile_context>
chip_gen: v5e
topology: v5e:2x2
jax: 0.10.0
libtpu: 0.0.40
codegen_flags: <defaults>
</compile_context>

<pallas_src>
import functools

import jax
import jax.numpy as jnp
from jax import lax
from jax.experimental import pallas as pl
from jax.experimental.pallas import tpu as pltpu

_TB_MAX = 512                  # batch tile (sublane axis, multiple of 8)
_TK_MAX = 4096                 # feature / reduction tile (lane axis, multiple of 128)
_W_RESIDENT_MAX_BYTES = 4 << 20  # keep the whole weight in VMEM below this size


def _round_up(x, m):
    return (x + m - 1) // m * m


def _perceptron_kernel(x_ref, w_ref, b_ref, o_ref, *,
                       apply_softmax, tk, rem, w_resident):
    # x_ref: (TB, TK)                     w_ref: (O, padded_F) or (O, TK)
    # b_ref: (1, O)                       o_ref: (TB, O) f32, VMEM-resident over K
    k = pl.program_id(1)
    last_k = pl.num_programs(1) - 1

    @pl.when(k == 0)
    def _():
        o_ref[...] = jnp.zeros_like(o_ref)

    x = x_ref[...]
    if rem:  # static: feature dim not a multiple of tk -> mask the ragged tail
        # Out-of-bounds columns of the last K tile contain garbage (x is NOT
        # padded in HBM); zero them so garbage (possibly NaN) never reaches
        # the MXU.  The zero-padded weight tail then contributes exactly 0.
        col = lax.broadcasted_iota(jnp.int32, x.shape, 1)
        keep = (k != last_k) | (col < rem)
        x = jnp.where(keep, x, 0.0)

    if w_resident:
        # Whole (O, padded_F) weight lives in VMEM; take the k-th K chunk.
        w = w_ref[:, pl.ds(pl.multiple_of(k * tk, 128), tk)]
    else:
        w = w_ref[...]

    # Contract the TK axis of x with the TK axis of w (i.e. x @ w.T) on the
    # MXU; no explicit transpose of the weight tile is materialized.
    o_ref[...] += lax.dot_general(
        x, w,
        dimension_numbers=(((1,), (1,)), ((), ())),
        preferred_element_type=jnp.float32,
        precision=lax.Precision.HIGHEST,
    )

    @pl.when(k == last_k)
    def _():
        y = o_ref[...] + b_ref[...]
        if apply_softmax:
            # Numerically-stable softmax over dim=1; exact divide (EUP/VPU is
            # not the bottleneck, and approx reciprocal broke tolerance).
            m = jnp.max(y, axis=-1, keepdims=True)
            e = jnp.exp(y - m)
            y = e / jnp.sum(e, axis=-1, keepdims=True)
        o_ref[...] = y.astype(o_ref.dtype)


def sentiment_classifier_perceptron(x_in, weight, bias, apply_softmax=False,
                                     *, block_b=None, block_k=None):
    """Forward pass of SentimentClassifierPerceptron.

    x_in:   (batch, num_features) f32
    weight: (output_dim, num_features) f32  (PyTorch nn.Linear layout, NOT transposed)
    bias:   (output_dim,) f32
    Returns (batch, output_dim) f32.
    """
    batch, num_features = x_in.shape
    output_dim = weight.shape[0]

    # --- tile selection -----------------------------------------------------
    tb = block_b if block_b is not None else min(_TB_MAX, _round_up(batch, 8))
    tb = max(8, _round_up(tb, 8))
    # v7x megacore: ensure the "parallel" batch axis has >= 2 tiles when the
    # batch is big enough, so both TensorCores get work (neutral on v5e/v6e).
    if block_b is None and pl.cdiv(batch, tb) < 2 and batch >= 16:
        tb = _round_up(pl.cdiv(batch, 2), 8)

    tk = block_k if block_k is not None else min(_TK_MAX, _round_up(num_features, 128))
    tk = max(128, _round_up(tk, 128))

    n_b = pl.cdiv(batch, tb)
    n_k = pl.cdiv(num_features, tk)
    padded_f = n_k * tk

    # Only the tiny weight is zero-padded along K (O * padded_F * 4 bytes);
    # x is streamed from HBM untouched (no extra read+write pass).
    if padded_f != num_features:
        w_p = jnp.pad(weight, ((0, 0), (0, padded_f - num_features)))
    else:
        w_p = weight
    b2d = bias.reshape(1, output_dim)

    # Weight residency: keep the whole weight in VMEM when it is small enough
    # (avoids re-streaming it once per batch tile).
    w_bytes = output_dim * padded_f * 4
    w_resident = w_bytes <= _W_RESIDENT_MAX_BYTES
    if w_resident:
        w_spec = pl.BlockSpec((output_dim, padded_f), lambda i, k: (0, 0))
    else:
        w_spec = pl.BlockSpec((output_dim, tk), lambda i, k: (0, k))

    kernel = functools.partial(
        _perceptron_kernel,
        apply_softmax=apply_softmax,
        tk=tk,
        rem=num_features % tk,
        w_resident=w_resident,
    )

    # VMEM budget: double-buffered x tile dominates; stay safely under v7x's
    # 64 MiB physical VMEM on every generation.
    vmem_bytes = (2 * tb * tk * 4            # x double-buffer
                  + 2 * w_bytes              # weight (conservatively 2x)
                  + 2 * tb * output_dim * 4  # output block
                  + 2 * output_dim * 4       # bias
                  + (8 << 20))               # headroom
    vmem_bytes = int(min(max(vmem_bytes, 32 << 20), 48 << 20))

    cost = pl.CostEstimate(
        flops=2 * batch * padded_f * output_dim,
        transcendentals=(batch * output_dim) if apply_softmax else 0,
        bytes_accessed=(batch * num_features * 4
                        + (1 if w_resident else n_b) * w_bytes
                        + batch * output_dim * 4),
    )

    return pl.pallas_call(
        kernel,
        out_shape=jax.ShapeDtypeStruct((batch, output_dim), jnp.float32),
        grid_spec=pl.GridSpec(
            grid=(n_b, n_k),
            in_specs=[
                pl.BlockSpec((tb, tk), lambda i, k: (i, k)),           # x tile
                w_spec,                                                # weight
                pl.BlockSpec((1, output_dim), lambda i, k: (0, 0)),    # bias
            ],
            out_specs=pl.BlockSpec((tb, output_dim), lambda i, k: (i, 0)),
        ),
        compiler_params=pltpu.CompilerParams(
            dimension_semantics=("parallel", "arbitrary"),
            vmem_limit_bytes=vmem_bytes,
        ),
        cost_estimate=cost,
    )(x_in, w_p, b2d)


if __name__ == "__main__":
    key = jax.random.PRNGKey(0)

    def make_params(kw, kb, output_dim, num_features):
        # Deterministic init mimicking nn.Linear default: U(-1/sqrt(F), 1/sqrt(F))
        bound = 1.0 / (num_features ** 0.5)
        weight = jax.random.uniform(kw, (output_dim, num_features), jnp.float32,
                                    -bound, bound)
        bias = jax.random.uniform(kb, (output_dim,), jnp.float32, -bound, bound)
        return weight, bias

    # --- Case 1: small shapes from the module spec (ragged batch + ragged K tail)
    batch, num_features, output_dim = 2, 32, 8
    kx, kw, kb, key = jax.random.split(key, 4)
    x_in = jax.random.normal(kx, (batch, num_features), dtype=jnp.float32)
    weight, bias = make_params(kw, kb, output_dim, num_features)

    y_logits = jax.block_until_ready(
        sentiment_classifier_perceptron(x_in, weight, bias, apply_softmax=False))
    y_probs = jax.block_until_ready(
        sentiment_classifier_perceptron(x_in, weight, bias, apply_softmax=True))

    ref_logits = jnp.dot(x_in, weight.T, precision=lax.Precision.HIGHEST) + bias
    ref_probs = jax.nn.softmax(ref_logits, axis=1)

    assert y_logits.shape == (batch, output_dim)
    assert y_probs.shape == (batch, output_dim)
    assert jnp.allclose(y_logits, ref_logits, atol=1e-5, rtol=1e-5)
    assert jnp.allclose(y_probs, ref_probs, atol=1e-5, rtol=1e-5)

    # --- Case 2: force multiple K tiles (block_k=128) to exercise the in-kernel
    #     ragged-K masking and the accumulate-into-output path.
    batch2, num_features2, output_dim2 = 5, 200, 3
    kx2, kw2, kb2, key = jax.random.split(key, 4)
    x2 = jax.random.normal(kx2, (batch2, num_features2), dtype=jnp.float32)
    w2, b2 = make_params(kw2, kb2, output_dim2, num_features2)

    y2 = jax.block_until_ready(
        sentiment_classifier_perceptron(x2, w2, b2, apply_softmax=True, block_k=128))
    ref2 = jax.nn.softmax(
        jnp.dot(x2, w2.T, precision=lax.Precision.HIGHEST) + b2, axis=1)
    assert y2.shape == (batch2, output_dim2)
    assert jnp.allclose(y2, ref2, atol=1e-5, rtol=1e-5)

    print("KERNEL_OK")
</pallas_src>

<mosaic_0001>
module attributes {stable_mosaic.version = 11 : i64} {
  func.func @_perceptron_kernel(%arg0: i32, %arg1: i32, %arg2: memref<8x128xf32, #tpu.memory_space<vmem>>, %arg3: memref<8x128xf32, #tpu.memory_space<vmem>>, %arg4: memref<1x8xf32, #tpu.memory_space<vmem>>, %arg5: memref<8x8xf32, #tpu.memory_space<vmem>>) attributes {dimension_semantics = [#tpu.dimension_semantics<parallel>, #tpu.dimension_semantics<arbitrary>], iteration_bounds = array<i64: 1, 1>, scalar_prefetch = 0 : i64, scratch_operands = 0 : i64, tpu.core_type = #tpu.core_type<tc>, window_params = [{transform_indices = @transform_0, window_bounds = array<i64: 8, 128>}, {pipeline_mode = #tpu.pipeline_mode<synchronous>, transform_indices = @transform_1, window_bounds = array<i64: 8, 128>}, {pipeline_mode = #tpu.pipeline_mode<synchronous>, transform_indices = @transform_2, window_bounds = array<i64: 1, 8>}, {transform_indices = @transform_3, window_bounds = array<i64: 8, 8>}]} {
    %c0_i32 = arith.constant 0 : i32
    %0 = arith.cmpi eq, %arg1, %c0_i32 : i32
    %1 = arith.extui %0 : i1 to i32
    %c0_i32_0 = arith.constant 0 : i32
    %2 = arith.cmpi ne, %1, %c0_i32_0 : i32
    scf.if %2 {
      %cst_11 = arith.constant 0.000000e+00 : f32
      %23 = vector.broadcast %cst_11 : f32 to vector<8x8xf32>
      %c0_12 = arith.constant 0 : index
      %c0_13 = arith.constant 0 : index
      %24 = vector.load %arg5[%c0_12, %c0_13] : memref<8x8xf32, #tpu.memory_space<vmem>>, vector<8x8xf32>
      tpu.vector_store %arg5[%c0_12, %c0_13], %23 {strides = array<i32>} : memref<8x8xf32, #tpu.memory_space<vmem>>, vector<8x8xf32>,
    } else {
    }
    %c0 = arith.constant 0 : index
    %c0_1 = arith.constant 0 : index
    %3 = vector.load %arg2[%c0, %c0_1] : memref<8x128xf32, #tpu.memory_space<vmem>>, vector<8x128xf32>
    %4 = tpu.iota {dimensions = array<i32: 1>} : vector<8x128xi32>
    %c0_i32_2 = arith.constant 0 : i32
    %5 = arith.cmpi ne, %arg1, %c0_i32_2 : i32
    %c32_i32 = arith.constant 32 : i32
    %6 = vector.broadcast %c32_i32 : i32 to vector<8x128xi32>
    %7 = arith.cmpi slt, %4, %6 : vector<8x128xi32>
    %8 = vector.broadcast %5 : i1 to vector<8x128xi1>
    %9 = arith.ori %8, %7 : vector<8x128xi1>
    %cst = arith.constant 0.000000e+00 : f32
    %10 = vector.broadcast %cst : f32 to vector<8x128xf32>
    %11 = arith.select %9, %3, %10 : vector<8x128xi1>, vector<8x128xf32>
    %c128_i32 = arith.constant 128 : i32
    %12 = arith.muli %arg1, %c128_i32 : i32
    %13 = tpu.assume_multiple %12, 128 : i32
    %c0_3 = arith.constant 0 : index
    %14 = arith.index_cast %13 : i32 to index
    %15 = vector.load %arg3[%c0_3, %14] : memref<8x128xf32, #tpu.memory_space<vmem>>, vector<8x128xf32>
    %c0_4 = arith.constant 0 : index
    %c0_5 = arith.constant 0 : index
    %16 = vector.load %arg5[%c0_4, %c0_5] : memref<8x8xf32, #tpu.memory_space<vmem>>, vector<8x8xf32>
    %cst_6 = arith.constant dense<0.000000e+00> : vector<8x8xf32>
    %17 = tpu.matmul %11, %15, %cst_6 {dimension_numbers = #tpu.dot_dimension_numbers<[1], [1], [0], [0], [0, 0, 1, 0], [], []>, precision = #tpu.contract_precision<fp32>} : vector<8x128xf32>, vector<8x128xf32>, vector<8x8xf32> -> vector<8x8xf32>
    %18 = arith.addf %16, %17 : vector<8x8xf32>
    %c0_7 = arith.constant 0 : index
    %c0_8 = arith.constant 0 : index
    %19 = vector.load %arg5[%c0_7, %c0_8] : memref<8x8xf32, #tpu.memory_space<vmem>>, vector<8x8xf32>
    tpu.vector_store %arg5[%c0_7, %c0_8], %18 {strides = array<i32>} : memref<8x8xf32, #tpu.memory_space<vmem>>, vector<8x8xf32>,
    %c0_i32_9 = arith.constant 0 : i32
    %20 = arith.cmpi eq, %arg1, %c0_i32_9 : i32
    %21 = arith.extui %20 : i1 to i32
    %c0_i32_10 = arith.constant 0 : i32
    %22 = arith.cmpi ne, %21, %c0_i32_10 : i32
    scf.if %22 {
      %c0_11 = arith.constant 0 : index
      %c0_12 = arith.constant 0 : index
      %23 = vector.load %arg5[%c0_11, %c0_12] : memref<8x8xf32, #tpu.memory_space<vmem>>, vector<8x8xf32>
      %c0_13 = arith.constant 0 : index
      %c0_14 = arith.constant 0 : index
      %24 = vector.load %arg4[%c0_13, %c0_14] : memref<1x8xf32, #tpu.memory_space<vmem>>, vector<1x8xf32>
      %25 = vector.broadcast %24 : vector<1x8xf32> to vector<8x8xf32>
      %26 = arith.addf %23, %25 : vector<8x8xf32>
      %c0_15 = arith.constant 0 : index
      %c0_16 = arith.constant 0 : index
      %27 = vector.load %arg5[%c0_15, %c0_16] : memref<8x8xf32, #tpu.memory_space<vmem>>, vector<8x8xf32>
      tpu.vector_store %arg5[%c0_15, %c0_16], %26 {strides = array<i32>} : memref<8x8xf32, #tpu.memory_space<vmem>>, vector<8x8xf32>,
    } else {
    }
    return
  }
  func.func @transform_0(%arg0: i32, %arg1: i32) -> (i32, i32) {
    %c0_i32 = arith.constant 0 : i32
    return %arg0, %arg1 : i32, i32
  }
  func.func @transform_1(%arg0: i32, %arg1: i32) -> (i32, i32) {
    %c0_i32 = arith.constant 0 : i32
    %c0_i32_0 = arith.constant 0 : i32
    %c0_i32_1 = arith.constant 0 : i32
    return %c0_i32, %c0_i32_0 : i32, i32
  }
  func.func @transform_2(%arg0: i32, %arg1: i32) -> (i32, i32) {
    %c0_i32 = arith.constant 0 : i32
    %c0_i32_0 = arith.constant 0 : i32
    %c0_i32_1 = arith.constant 0 : i32
    return %c0_i32, %c0_i32_0 : i32, i32
  }
  func.func @transform_3(%arg0: i32, %arg1: i32) -> (i32, i32) {
    %c0_i32 = arith.constant 0 : i32
    %c0_i32_0 = arith.constant 0 : i32
    return %arg0, %c0_i32 : i32, i32
  }
}

</mosaic_0001>

<llo_original>
// kernel: tpu_custom_call.1
$region0: #{tpu_custom_call.1}
  #allocation0 [shape = 'u32[]', space=smem, size = 0x4, offset = 0x4, fixed_abs, tag = 'smem constant byte address 0x4 - core index']
  #allocation1 [shape = 'u32[72,128]{1,0:T(1,128)}', space=vmem, size = 0x9000, scoped, tag = 'internal scratch']
  %s0 = inlined_call_operand.hbm [shape: f32[2,32], index: 0, kind: input, shape index: {}]
  %s1 = inlined_call_operand.hbm [shape: f32[8,128], index: 1, kind: input, shape index: {}]
  %s2 = inlined_call_operand.vmem [shape: f32[1,8], index: 2, kind: input, shape index: {}]
  %s3 = inlined_call_operand.hbm [shape: f32[2,8], index: 3, kind: output, shape index: {}]
  %s4 = sld [smem:[#allocation0]]
  $region38: #{tpu_custom_call.1} parent=0
    _
  %s6 = ssub.s32 1, %s4
  %s7 = scalar_select 0, %s6, %s4
  $region1: #{tpu_custom_call.1} parent=0
    #allocation2 [shape = 'u8[4096]{0}', space=vmem, size = 0x1000, scoped, tag = 'input window, operand 0, single buffered']
    #allocation3 [shape = 's32[1]{0}', space=sflag, size = 0x4, scoped, tag = 'scoped memory for tpu_custom_call.1']
    #allocation4 [shape = 's32[1]{0}', space=sflag, size = 0x4, scoped, tag = 'scoped memory for tpu_custom_call.1']
    #allocation5 [shape = 'u8[4096]{0}', space=vmem, size = 0x1000, scoped, tag = 'input window, operand 1, single buffered']
    #allocation6 [shape = 's32[1]{0}', space=sflag, size = 0x4, scoped, tag = 'scoped memory for tpu_custom_call.1']
    #allocation7 [shape = 'u8[4096]{0}', space=vmem, size = 0x1000, scoped, tag = 'output window, operand 0, single buffered']
    %8 = vsyncpa [#allocation3], 0
    %9 = vsyncpa [#allocation6], 0
    %10 = vsyncpa [#allocation4], 0
    // Predicated region
    $region2: #{tpu_custom_call.1} parent=1 // pred_check
      _
    $region3: #{tpu_custom_call.1} parent=1 // pred_check_branch
      %12 = sbr.rel (0) target = $region5
    $region4: #{tpu_custom_call.1} parent=1 // pred_region
      %14 = vsyncadd [#allocation3], 96
      %s15 = sshll.u32 %s0, 4
      %s16 = int_to_ptr.hbm [resolvable:$true] %s15
      %s17 = sshll.u32 [#allocation2], 4
      %s18 = int_to_ptr.vmem [resolvable:$true] %s17
      %23 = dma.hbm_to_vmem [thread:$0]  %s16, 32, %s18, [#allocation3], 32, 32, 2
    $region5: #{tpu_custom_call.1} parent=1 // pred_fallthru
      _
    // Predicated region
    $region6: #{tpu_custom_call.1} parent=1 // pred_check
      _
    $region7: #{tpu_custom_call.1} parent=1 // pred_check_branch
      %25 = sbr.rel (0) target = $region9
    $region8: #{tpu_custom_call.1} parent=1 // pred_region
      %27 = vsyncadd [#allocation6], 0
      %s29 = sshll.u32 %s1, 4
      %s30 = int_to_ptr.hbm [resolvable:$true] %s29
      %s31 = sshll.u32 [#allocation5], 4
      %s32 = int_to_ptr.vmem [resolvable:$true] %s31
      %34 = dma.hbm_to_vmem [thread:$0]  %s30, 128, %s32, [#allocation6]
    $region9: #{tpu_custom_call.1} parent=1 // pred_fallthru
      _
    // Predicated region
    $region10: #{tpu_custom_call.1} parent=1 // pred_check
      _
    $region11: #{tpu_custom_call.1} parent=1 // pred_check_branch
      %36 = sbr.rel (0) target = $region13
    $region12: #{tpu_custom_call.1} parent=1 // pred_region
      _
    $region13: #{tpu_custom_call.1} parent=1 // pred_fallthru
      _
    // Predicated region
    $region14: #{tpu_custom_call.1} parent=1 // pred_check
      _
    $region15: #{tpu_custom_call.1} parent=1 // pred_check_branch
      %38 = sbr.rel (0) target = $region17
    $region16: #{tpu_custom_call.1} parent=1 // pred_region
      %40 = dma.done [#allocation3], 128
    $region17: #{tpu_custom_call.1} parent=1 // pred_fallthru
      _
    // Predicated region
    $region18: #{tpu_custom_call.1} parent=1 // pred_check
      _
    $region19: #{tpu_custom_call.1} parent=1 // pred_check_branch
      %42 = sbr.rel (0) target = $region21
    $region20: #{tpu_custom_call.1} parent=1 // pred_region
      %44 = dma.done [#allocation6], 128
    $region21: #{tpu_custom_call.1} parent=1 // pred_fallthru
      _
    %p45 = scmp.eq.s32.totalorder 0, 0
    // Predicated region
    $region22: #{tpu_custom_call.1} parent=1 // pred_check
      %p46 = pneg %p45
    $region23: #{tpu_custom_call.1} parent=1 // pred_check_branch
      %48 = sbr.rel (%p46) target = $region25
    $region24: #{tpu_custom_call.1} parent=1 // pred_region
      %vm49 = vcmask 64512
      %50 = vst.msk [vmem:[#allocation7] sm:$0xff] %vm49, 0.0
    $region25: #{tpu_custom_call.1} parent=1 // pred_fallthru
      _
    %v51 = vld [vmem:[#allocation2] sm:$0xff]
    %v52 = vlaneseq
    %v53 = vand.u32 %v52, 127
    %p54 = scmp.ne.s32.totalorder 0, 0
    %vm55 = vcmp.lt.s32.totalorder %v53, 32
    %s56 = scalar_select %p54, 1, 0
    %v57 = vstv %s56
    %vm58 = vcmp.eq.s32.totalorder %v57, 1
    %vm59 = vmor %vm58, %vm55
    %v60 = vsel %vm59, %v51, 0.0
    %s61 = smul.u32 0, 128
    %s62 = sshra.s32 %s61, 7
    %s63 = sand.u32 %s61, 127
    %s64 = scalar_lea.vmem [#allocation5], %s62
    %v65 = vld [vmem:[%s64] sm:$0xff]
    %v66 = vld [vmem:[#allocation7] sm:$0xff]
    %67 = vmatpush.xpose.msra.mxu0 0.0
    %68 = vmatpush.xpose.msra.mxu0 0.0
    %69 = vmatpush.xpose.msra.mxu0 0.0
    %70 = vmatpush.xpose.msra.mxu0 0.0
    %71 = vmatpush.xpose.msra.mxu0 0.0
    %72 = vmatpush.xpose.msra.mxu0 0.0
    %73 = vmatpush.xpose.msra.mxu0 0.0
    %74 = vmatpush.xpose.msra.mxu0 0.0
    %75 = vmatpush.xpose.msra.mxu0 0.0
    %76 = vmatpush.xpose.msra.mxu0 0.0
    %77 = vmatpush.xpose.msra.mxu0 0.0
    %78 = vmatpush.xpose.msra.mxu0 0.0
    %79 = vmatpush.xpose.msra.mxu0 0.0
    %80 = vmatpush.xpose.msra.mxu0 0.0
    %81 = vmatpush.xpose.msra.mxu0 0.0
    %v82 = vand.u32 %v65, 4294901760
    %83 = vmatpush.xpose.msra.mxu0 %v82
    %v84 = vand.u32 %v60, 4294901760
    %v85 = vsub.f32 %v60, %v84
    %v86 = vand.u32 %v85, 4294901760
    %v87 = vsub.f32 %v85, %v86
    %v88 = vand.u32 %v87, 4294901760
    %89 = vmatmul.f32.gmra.mxu0 %v88
    %v90 = vpop.f32.mrf.mxu0
    %v91 = vadd.f32 0.0, %v90
    %92 = vdwg.mxu0
    %93 = vmatpush.xpose.msra.mxu0 0.0
    %94 = vmatpush.xpose.msra.mxu0 0.0
    %95 = vmatpush.xpose.msra.mxu0 0.0
    %96 = vmatpush.xpose.msra.mxu0 0.0
    %97 = vmatpush.xpose.msra.mxu0 0.0
    %98 = vmatpush.xpose.msra.mxu0 0.0
    %99 = vmatpush.xpose.msra.mxu0 0.0
    %100 = vmatpush.xpose.msra.mxu0 0.0
    %101 = vmatpush.xpose.msra.mxu0 0.0
    %102 = vmatpush.xpose.msra.mxu0 0.0
    %103 = vmatpush.xpose.msra.mxu0 0.0
    %104 = vmatpush.xpose.msra.mxu0 0.0
    %105 = vmatpush.xpose.msra.mxu0 0.0
    %106 = vmatpush.xpose.msra.mxu0 0.0
    %107 = vmatpush.xpose.msra.mxu0 0.0
    %v108 = vand.u32 %v65, 4294901760
    %v109 = vsub.f32 %v65, %v108
    %v110 = vand.u32 %v109, 4294901760
    %v111 = vsub.f32 %v109, %v110
    %v112 = vand.u32 %v111, 4294901760
    %113 = vmatpush.xpose.msra.mxu0 %v112
    %v114 = vand.u32 %v60, 4294901760
    %115 = vmatmul.f32.gmra.mxu0 %v114
    %v116 = vpop.f32.mrf.mxu0
    %v117 = vadd.f32 %v91, %v116
    %118 = vdwg.mxu0
    %119 = vmatpush.xpose.msra.mxu0 0.0
    %120 = vmatpush.xpose.msra.mxu0 0.0
    %121 = vmatpush.xpose.msra.mxu0 0.0
    %122 = vmatpush.xpose.msra.mxu0 0.0
    %123 = vmatpush.xpose.msra.mxu0 0.0
    %124 = vmatpush.xpose.msra.mxu0 0.0
    %125 = vmatpush.xpose.msra.mxu0 0.0
    %126 = vmatpush.xpose.msra.mxu0 0.0
    %127 = vmatpush.xpose.msra.mxu0 0.0
    %128 = vmatpush.xpose.msra.mxu0 0.0
    %129 = vmatpush.xpose.msra.mxu0 0.0
    %130 = vmatpush.xpose.msra.mxu0 0.0
    %131 = vmatpush.xpose.msra.mxu0 0.0
    %132 = vmatpush.xpose.msra.mxu0 0.0
    %133 = vmatpush.xpose.msra.mxu0 0.0
    %v134 = vand.u32 %v65, 4294901760
    %v135 = vsub.f32 %v65, %v134
    %136 = vmatpush.xpose.msra.mxu0 %v135
    %v137 = vand.u32 %v60, 4294901760
    %v138 = vsub.f32 %v60, %v137
    %139 = vmatmul.f32.gmra.mxu0 %v138
    %v140 = vpop.f32.mrf.mxu0
    %v141 = vadd.f32 %v117, %v140
    %142 = vdwg.mxu0
    %143 = vmatpush.xpose.msra.mxu0 0.0
    %144 = vmatpush.xpose.msra.mxu0 0.0
    %145 = vmatpush.xpose.msra.mxu0 0.0
    %146 = vmatpush.xpose.msra.mxu0 0.0
    %147 = vmatpush.xpose.msra.mxu0 0.0
    %148 = vmatpush.xpose.msra.mxu0 0.0
    %149 = vmatpush.xpose.msra.mxu0 0.0
    %150 = vmatpush.xpose.msra.mxu0 0.0
    %151 = vmatpush.xpose.msra.mxu0 0.0
    %152 = vmatpush.xpose.msra.mxu0 0.0
    %153 = vmatpush.xpose.msra.mxu0 0.0
    %154 = vmatpush.xpose.msra.mxu0 0.0
    %155 = vmatpush.xpose.msra.mxu0 0.0
    %156 = vmatpush.xpose.msra.mxu0 0.0
    %157 = vmatpush.xpose.msra.mxu0 0.0
    %v158 = vand.u32 %v65, 4294901760
    %159 = vmatpush.xpose.msra.mxu0 %v158
    %v160 = vand.u32 %v60, 4294901760
    %v161 = vsub.f32 %v60, %v160
    %v162 = vand.u32 %v161, 4294901760
    %163 = vmatmul.f32.gmra.mxu0 %v162
    %v164 = vpop.f32.mrf.mxu0
    %v165 = vadd.f32 %v141, %v164
    %166 = vdwg.mxu0
    %167 = vmatpush.xpose.msra.mxu0 0.0
    %168 = vmatpush.xpose.msra.mxu0 0.0
    %169 = vmatpush.xpose.msra.mxu0 0.0
    %170 = vmatpush.xpose.msra.mxu0 0.0
    %171 = vmatpush.xpose.msra.mxu0 0.0
    %172 = vmatpush.xpose.msra.mxu0 0.0
    %173 = vmatpush.xpose.msra.mxu0 0.0
    %174 = vmatpush.xpose.msra.mxu0 0.0
    %175 = vmatpush.xpose.msra.mxu0 0.0
    %176 = vmatpush.xpose.msra.mxu0 0.0
    %177 = vmatpush.xpose.msra.mxu0 0.0
    %178 = vmatpush.xpose.msra.mxu0 0.0
    %179 = vmatpush.xpose.msra.mxu0 0.0
    %180 = vmatpush.xpose.msra.mxu0 0.0
    %181 = vmatpush.xpose.msra.mxu0 0.0
    %v182 = vand.u32 %v65, 4294901760
    %v183 = vsub.f32 %v65, %v182
    %v184 = vand.u32 %v183, 4294901760
    %185 = vmatpush.xpose.msra.mxu0 %v184
    %v186 = vand.u32 %v60, 4294901760
    %187 = vmatmul.f32.gmra.mxu0 %v186
    %v188 = vpop.f32.mrf.mxu0
    %v189 = vadd.f32 %v165, %v188
    %190 = vdwg.mxu0
    %191 = vmatpush.xpose.msra.mxu0 0.0
    %192 = vmatpush.xpose.msra.mxu0 0.0
    %193 = vmatpush.xpose.msra.mxu0 0.0
    %194 = vmatpush.xpose.msra.mxu0 0.0
    %195 = vmatpush.xpose.msra.mxu0 0.0
    %196 = vmatpush.xpose.msra.mxu0 0.0
    %197 = vmatpush.xpose.msra.mxu0 0.0
    %198 = vmatpush.xpose.msra.mxu0 0.0
    %199 = vmatpush.xpose.msra.mxu0 0.0
    %200 = vmatpush.xpose.msra.mxu0 0.0
    %201 = vmatpush.xpose.msra.mxu0 0.0
    %202 = vmatpush.xpose.msra.mxu0 0.0
    %203 = vmatpush.xpose.msra.mxu0 0.0
    %204 = vmatpush.xpose.msra.mxu0 0.0
    %205 = vmatpush.xpose.msra.mxu0 0.0
    %v206 = vand.u32 %v65, 4294901760
    %207 = vmatpush.xpose.msra.mxu0 %v206
    %v208 = vand.u32 %v60, 4294901760
    %209 = vmatmul.f32.gmra.mxu0 %v208
    %v210 = vpop.f32.mrf.mxu0
    %v211 = vadd.f32 %v189, %v210
    %212 = vdwg.mxu0
    %v213 = vadd.f32 %v66, %v211
    %vm214 = vcmask 64512
    %215 = vst.msk [vmem:[#allocation7] sm:$0xff] %vm214, %v213
    // Predicated region
    $region26: #{tpu_custom_call.1} parent=1 // pred_check
      %p216 = pneg %p45
    $region27: #{tpu_custom_call.1} parent=1 // pred_check_branch
      %218 = sbr.rel (%p216) target = $region29
    $region28: #{tpu_custom_call.1} parent=1 // pred_region
      %v219 = vld [vmem:[#allocation7] sm:$0xff]
      %v220 = vld [vmem:[%s2] sm:$0x1]
      %v222 = vperm.slane %v220, 0
      %v224 = vadd.f32 %v219, %v222
      %225 = vst.msk [vmem:[#allocation7] sm:$0xff] %vm214, %v224
    $region29: #{tpu_custom_call.1} parent=1 // pred_fallthru
      _
    // Predicated region
    $region30: #{tpu_custom_call.1} parent=1 // pred_check
      _
    $region31: #{tpu_custom_call.1} parent=1 // pred_check_branch
      %227 = sbr.rel (0) target = $region33
    $region32: #{tpu_custom_call.1} parent=1 // pred_region
      %229 = vsyncadd [#allocation4], 96
      %s230 = sshll.u32 [#allocation7], 4
      %s231 = int_to_ptr.vmem [resolvable:$true] %s230
      %s232 = sshll.u32 %s3, 4
      %s233 = int_to_ptr.hbm [resolvable:$true] %s232
      %238 = dma.vmem_to_hbm [thread:$0]  %s231, 32, %s233, [#allocation4], 32, 32, 2
    $region33: #{tpu_custom_call.1} parent=1 // pred_fallthru
      _
    // Predicated region
    $region34: #{tpu_custom_call.1} parent=1 // pred_check
      _
    $region35: #{tpu_custom_call.1} parent=1 // pred_check_branch
      %240 = sbr.rel (0) target = $region37
    $region36: #{tpu_custom_call.1} parent=1 // pred_region
      %242 = dma.done [#allocation4], 128
    $region37: #{tpu_custom_call.1} parent=1 // pred_fallthru
      _
    %243 = vsyncpa [#allocation3], 1
    %244 = vsyncpa [#allocation6], 1
    %245 = vsyncpa [#allocation4], 1

</llo_original>
